<compile_context>
chip_gen: v7x
topology: tpu7x:2x2x1
jax: 0.10.0
libtpu: 0.0.40
codegen_flags: <defaults>
</compile_context>

<pallas_src>
import jax
import jax.numpy as jnp
from jax.experimental import pallas as pl
from jax.experimental.pallas import tpu as pltpu

BN_EPS = 1e-5
ALPHA_LO, ALPHA_HI = -0.3, 0.3
LABDA_LO, LABDA_HI = 0.01, 18.0

N_IN, N_HID, N_OUT = 8, 4, 2

SB = 8                       # sublanes per compute chunk (one f32 sublane group)
MAX_CLANES = 1024            # lanes per compute chunk
CHUNK_SP = SB * MAX_CLANES   # 8192 samples per in-kernel compute chunk
MIN_SP = SB * 128            # 1024-sample minimum block (128-lane alignment)
MAX_CHUNKS = 16              # up to 131072 samples (~5 MiB traffic) per grid step


def _round_up(n, m):
    return (n + m - 1) // m * m


def _block_geometry(batch):
    """(samples per grid step, chunks per step, lanes per chunk)."""
    # Aim for >= 2 grid steps once the batch is big (v7x has 2 TensorCores),
    # capped by a VMEM-budget-derived maximum block.
    target = _round_up(max(1, (batch + 1) // 2), MIN_SP)
    sp = max(MIN_SP, min(MAX_CHUNKS * CHUNK_SP, target))
    if sp > CHUNK_SP:
        sp = min(MAX_CHUNKS * CHUNK_SP, _round_up(sp, CHUNK_SP))
        return sp, sp // CHUNK_SP, MAX_CLANES
    return sp, 1, sp // SB


def mlp21_kernel(w1_ref, b1_ref, w2_ref, b2_ref, x_ref, out_ref):
    """Sublane+lane dense streaming kernel.

    w1_ref : (8, 4) SMEM  -- BN scale folded in
    b1_ref : (4,)   SMEM  -- BN shift folded in
    w2_ref : (4, 2) SMEM  -- [alpha | labda] head weights
    b2_ref : (2,)   SMEM  -- [alpha | labda] head biases
    x_ref  : (NC, 8, SB, CL) VMEM -- NC compute chunks, features on axis 1
    out_ref: (NC, 2, SB, CL) VMEM -- row 0 = alpha, row 1 = labda
    """
    nc = x_ref.shape[0]

    # Hoist scalar weight reads out of the chunk loop (loop-invariant scalars).
    w1 = [[w1_ref[k, j] for j in range(N_HID)] for k in range(N_IN)]
    b1 = [b1_ref[j] for j in range(N_HID)]
    wa = [w2_ref[j, 0] for j in range(N_HID)]
    wl = [w2_ref[j, 1] for j in range(N_HID)]
    ba = b2_ref[0]
    bl = b2_ref[1]

    def chunk_body(c):
        # First Linear (BN folded): read each feature tile once per chunk and
        # accumulate all 4 hidden units -> x is loaded from VMEM exactly once.
        hs = [None] * N_HID
        for k in range(N_IN):
            xk = x_ref[c, k]                           # dense (SB, CL) f32 tile
            for j in range(N_HID):
                t = xk * w1[k][j]
                hs[j] = t if k == 0 else hs[j] + t
        a = None
        lam = None
        for j in range(N_HID):
            h = jnp.maximum(hs[j] + b1[j], 0.0)        # ReLU, (SB, CL)
            a = h * wa[j] if j == 0 else a + h * wa[j]
            lam = h * wl[j] if j == 0 else lam + h * wl[j]
        a = jnp.clip(jnp.tanh(a + ba), ALPHA_LO, ALPHA_HI)
        lam = jnp.clip(jnp.maximum(lam + bl, 0.0), LABDA_LO, LABDA_HI)
        out_ref[c] = jnp.stack([a, lam], axis=0)       # one dense (2, SB, CL) store

    if nc == 1:
        chunk_body(0)
    else:
        pl.loop(0, nc)(chunk_body)


@jax.jit
def mlp_2_1_forward(x, params):
    """x: (B, 1, 8) float32 -> (alpha (B, 1), labda (B, 1)).

    Matches MLP_2_1.forward with BatchNorm in training mode (biased batch stats).
    """
    g, beta, w1, b1, wa, ba, wl, bl = params
    x2 = jnp.squeeze(x, axis=1).astype(jnp.float32)           # (B, 8)
    B = x2.shape[0]

    # --- BatchNorm folded into the first Linear.  Stats are computed in one fused
    #     pass over x (E[x], E[x^2]) so x is read from HBM once for the stats;
    #     the clamp guards the E[x^2]-E[x]^2 cancellation for badly-centered data.
    # TODO(synk): eval-mode would use running_mean/running_var (and update them);
    #             buffer updates are not modeled here.
    mean = jnp.mean(x2, axis=0)                               # (8,)
    mean_sq = jnp.mean(x2 * x2, axis=0)                       # (8,)
    var = jnp.maximum(mean_sq - mean * mean, 0.0)             # biased, PyTorch train()
    scale = g * jax.lax.rsqrt(var + BN_EPS)                   # (8,)
    shift = beta - mean * scale                               # (8,)
    w1_eff = scale[:, None] * w1                              # (8, 4)
    b1_eff = b1 + shift @ w1                                  # (4,)

    # --- Fuse the two heads into one Linear(4 -> 2): col 0 = alpha, col 1 = labda.
    w2 = jnp.concatenate([wa, wl], axis=1)                    # (4, 2)
    b2 = jnp.concatenate([ba, bl], axis=0)                    # (2,)

    # --- Pack the batch sublane+lane dense: (G, NC, 8_feat, SB, CLANES).
    sp, nc, cl = _block_geometry(B)
    B_pad = _round_up(B, sp)
    G = B_pad // sp
    x_pad = jnp.pad(x2, ((0, B_pad - B), (0, 0)))             # (B_pad, 8)
    x_blk = jnp.transpose(x_pad.reshape(G, nc, SB, cl, N_IN), (0, 1, 4, 2, 3))
    # TODO(synk): fold this transpose into the kernel with a strided DMA straight
    #             from the (B, 8) layout so x is read from HBM exactly once.

    smem = pl.BlockSpec(memory_space=pltpu.MemorySpace.SMEM)
    out = pl.pallas_call(
        mlp21_kernel,
        out_shape=jax.ShapeDtypeStruct((G, nc, N_OUT, SB, cl), jnp.float32),
        grid=(G,),
        in_specs=[
            smem,                                             # w1_eff (8, 4)
            smem,                                             # b1_eff (4,)
            smem,                                             # w2     (4, 2)
            smem,                                             # b2     (2,)
            pl.BlockSpec((None, nc, N_IN, SB, cl), lambda i: (i, 0, 0, 0, 0)),
        ],
        out_specs=pl.BlockSpec((None, nc, N_OUT, SB, cl), lambda i: (i, 0, 0, 0, 0)),
        compiler_params=pltpu.CompilerParams(
            dimension_semantics=("parallel",),
            vmem_limit_bytes=32 * 1024 * 1024,
        ),
        cost_estimate=pl.CostEstimate(
            flops=90 * B_pad, transcendentals=B_pad, bytes_accessed=40 * B_pad),
    )(w1_eff, b1_eff, w2, b2, x_blk)

    alpha = out[:, :, 0].reshape(B_pad)[:B, None]             # (B, 1)
    labda = out[:, :, 1].reshape(B_pad)[:B, None]             # (B, 1)
    return alpha, labda


def make_params(key):
    """Deterministic synthetic parameters with PyTorch-init-like scales."""
    ks = jax.random.split(key, 6)
    # BatchNorm1d affine defaults: gamma = 1, beta = 0
    g = jnp.ones((N_IN,), jnp.float32)
    beta = jnp.zeros((N_IN,), jnp.float32)
    # Linear(8, 4): U(-1/sqrt(8), 1/sqrt(8)); stored as (in, out) for x @ W
    lim1 = 1.0 / jnp.sqrt(8.0)
    w1 = jax.random.uniform(ks[0], (N_IN, N_HID), jnp.float32, -lim1, lim1)
    b1 = jax.random.uniform(ks[1], (N_HID,), jnp.float32, -lim1, lim1)
    # Linear(4, 1) heads: U(-1/2, 1/2)
    lim2 = 0.5
    wa = jax.random.uniform(ks[2], (N_HID, 1), jnp.float32, -lim2, lim2)
    ba = jax.random.uniform(ks[3], (1,), jnp.float32, -lim2, lim2)
    wl = jax.random.uniform(ks[4], (N_HID, 1), jnp.float32, -lim2, lim2)
    bl = jax.random.uniform(ks[5], (1,), jnp.float32, -lim2, lim2)
    return (g, beta, w1, b1, wa, ba, wl, bl)


def _reference(x, params):
    """Pure-JAX reference of the PyTorch forward (training-mode BN)."""
    g, beta, w1, b1, wa, ba, wl, bl = params
    x2 = jnp.squeeze(x, axis=1).astype(jnp.float32)
    mean = jnp.mean(x2, axis=0)
    var = jnp.mean(jnp.square(x2 - mean), axis=0)
    xh = (x2 - mean) * jax.lax.rsqrt(var + BN_EPS) * g + beta
    h = jnp.maximum(xh @ w1 + b1, 0.0)
    a = jnp.clip(jnp.tanh(h @ wa + ba), ALPHA_LO, ALPHA_HI)
    l = jnp.clip(jnp.maximum(h @ wl + bl, 0.0), LABDA_LO, LABDA_HI)
    return a, l


if __name__ == "__main__":
    key = jax.random.PRNGKey(0)
    k_x, k_p, k_x2 = jax.random.split(key, 3)
    params = make_params(k_p)

    # Small example consistent with the module: batch of 8 samples, 8 features.
    B = 8
    x = jax.random.normal(k_x, (B, 1, N_IN), jnp.float32)
    alpha, labda = mlp_2_1_forward(x, params)
    jax.block_until_ready((alpha, labda))

    assert alpha.shape == (B, 1) and labda.shape == (B, 1)
    assert bool(jnp.all(alpha >= ALPHA_LO - 1e-6)) and bool(jnp.all(alpha <= ALPHA_HI + 1e-6))
    assert bool(jnp.all(labda >= LABDA_LO - 1e-6)) and bool(jnp.all(labda <= LABDA_HI + 1e-6))
    a_ref, l_ref = _reference(x, params)
    assert bool(jnp.allclose(alpha, a_ref, atol=2e-5, rtol=1e-4)), "alpha mismatch (B=8)"
    assert bool(jnp.allclose(labda, l_ref, atol=2e-5, rtol=1e-4)), "labda mismatch (B=8)"

    # Consistency check exercising the multi-chunk / multi-grid-step path.
    B2 = 20000
    x_big = jax.random.normal(k_x2, (B2, 1, N_IN), jnp.float32)
    a2, l2 = mlp_2_1_forward(x_big, params)
    jax.block_until_ready((a2, l2))
    a2_ref, l2_ref = _reference(x_big, params)
    assert bool(jnp.allclose(a2, a2_ref, atol=2e-5, rtol=1e-4)), "alpha mismatch (B=20000)"
    assert bool(jnp.allclose(l2, l2_ref, atol=2e-5, rtol=1e-4)), "labda mismatch (B=20000)"

    print("KERNEL_OK")
</pallas_src>

<mosaic_0001>
module attributes {stable_mosaic.version = 11 : i64} {
  func.func @mlp21_kernel(%arg0: i32, %arg1: memref<8x4xf32, #tpu.memory_space<smem>>, %arg2: memref<4xf32, #tpu.memory_space<smem>>, %arg3: memref<4x2xf32, #tpu.memory_space<smem>>, %arg4: memref<2xf32, #tpu.memory_space<smem>>, %arg5: memref<1x1x8x8x128xf32, #tpu.memory_space<vmem>>, %arg6: memref<1x1x2x8x128xf32, #tpu.memory_space<vmem>>) attributes {dimension_semantics = [#tpu.dimension_semantics<parallel>], iteration_bounds = array<i64: 1>, scalar_prefetch = 0 : i64, scratch_operands = 0 : i64, tpu.core_type = #tpu.core_type<tc>, window_params = [{transform_indices = @transform_0, window_bounds = array<i64: 8, 4>}, {transform_indices = @transform_1, window_bounds = array<i64: 4>}, {transform_indices = @transform_2, window_bounds = array<i64: 4, 2>}, {transform_indices = @transform_3, window_bounds = array<i64: 2>}, {transform_indices = @transform_4, window_bounds = array<i64: 1, 1, 8, 8, 128>}, {transform_indices = @transform_5, window_bounds = array<i64: 1, 1, 2, 8, 128>}]} {
    %c0 = arith.constant 0 : index
    %c0_0 = arith.constant 0 : index
    %0 = memref.load %arg1[%c0, %c0_0] : memref<8x4xf32, #tpu.memory_space<smem>>
    %c0_1 = arith.constant 0 : index
    %c1 = arith.constant 1 : index
    %1 = memref.load %arg1[%c0_1, %c1] : memref<8x4xf32, #tpu.memory_space<smem>>
    %c0_2 = arith.constant 0 : index
    %c2 = arith.constant 2 : index
    %2 = memref.load %arg1[%c0_2, %c2] : memref<8x4xf32, #tpu.memory_space<smem>>
    %c0_3 = arith.constant 0 : index
    %c3 = arith.constant 3 : index
    %3 = memref.load %arg1[%c0_3, %c3] : memref<8x4xf32, #tpu.memory_space<smem>>
    %c1_4 = arith.constant 1 : index
    %c0_5 = arith.constant 0 : index
    %4 = memref.load %arg1[%c1_4, %c0_5] : memref<8x4xf32, #tpu.memory_space<smem>>
    %c1_6 = arith.constant 1 : index
    %c1_7 = arith.constant 1 : index
    %5 = memref.load %arg1[%c1_6, %c1_7] : memref<8x4xf32, #tpu.memory_space<smem>>
    %c1_8 = arith.constant 1 : index
    %c2_9 = arith.constant 2 : index
    %6 = memref.load %arg1[%c1_8, %c2_9] : memref<8x4xf32, #tpu.memory_space<smem>>
    %c1_10 = arith.constant 1 : index
    %c3_11 = arith.constant 3 : index
    %7 = memref.load %arg1[%c1_10, %c3_11] : memref<8x4xf32, #tpu.memory_space<smem>>
    %c2_12 = arith.constant 2 : index
    %c0_13 = arith.constant 0 : index
    %8 = memref.load %arg1[%c2_12, %c0_13] : memref<8x4xf32, #tpu.memory_space<smem>>
    %c2_14 = arith.constant 2 : index
    %c1_15 = arith.constant 1 : index
    %9 = memref.load %arg1[%c2_14, %c1_15] : memref<8x4xf32, #tpu.memory_space<smem>>
    %c2_16 = arith.constant 2 : index
    %c2_17 = arith.constant 2 : index
    %10 = memref.load %arg1[%c2_16, %c2_17] : memref<8x4xf32, #tpu.memory_space<smem>>
    %c2_18 = arith.constant 2 : index
    %c3_19 = arith.constant 3 : index
    %11 = memref.load %arg1[%c2_18, %c3_19] : memref<8x4xf32, #tpu.memory_space<smem>>
    %c3_20 = arith.constant 3 : index
    %c0_21 = arith.constant 0 : index
    %12 = memref.load %arg1[%c3_20, %c0_21] : memref<8x4xf32, #tpu.memory_space<smem>>
    %c3_22 = arith.constant 3 : index
    %c1_23 = arith.constant 1 : index
    %13 = memref.load %arg1[%c3_22, %c1_23] : memref<8x4xf32, #tpu.memory_space<smem>>
    %c3_24 = arith.constant 3 : index
    %c2_25 = arith.constant 2 : index
    %14 = memref.load %arg1[%c3_24, %c2_25] : memref<8x4xf32, #tpu.memory_space<smem>>
    %c3_26 = arith.constant 3 : index
    %c3_27 = arith.constant 3 : index
    %15 = memref.load %arg1[%c3_26, %c3_27] : memref<8x4xf32, #tpu.memory_space<smem>>
    %c4 = arith.constant 4 : index
    %c0_28 = arith.constant 0 : index
    %16 = memref.load %arg1[%c4, %c0_28] : memref<8x4xf32, #tpu.memory_space<smem>>
    %c4_29 = arith.constant 4 : index
    %c1_30 = arith.constant 1 : index
    %17 = memref.load %arg1[%c4_29, %c1_30] : memref<8x4xf32, #tpu.memory_space<smem>>
    %c4_31 = arith.constant 4 : index
    %c2_32 = arith.constant 2 : index
    %18 = memref.load %arg1[%c4_31, %c2_32] : memref<8x4xf32, #tpu.memory_space<smem>>
    %c4_33 = arith.constant 4 : index
    %c3_34 = arith.constant 3 : index
    %19 = memref.load %arg1[%c4_33, %c3_34] : memref<8x4xf32, #tpu.memory_space<smem>>
    %c5 = arith.constant 5 : index
    %c0_35 = arith.constant 0 : index
    %20 = memref.load %arg1[%c5, %c0_35] : memref<8x4xf32, #tpu.memory_space<smem>>
    %c5_36 = arith.constant 5 : index
    %c1_37 = arith.constant 1 : index
    %21 = memref.load %arg1[%c5_36, %c1_37] : memref<8x4xf32, #tpu.memory_space<smem>>
    %c5_38 = arith.constant 5 : index
    %c2_39 = arith.constant 2 : index
    %22 = memref.load %arg1[%c5_38, %c2_39] : memref<8x4xf32, #tpu.memory_space<smem>>
    %c5_40 = arith.constant 5 : index
    %c3_41 = arith.constant 3 : index
    %23 = memref.load %arg1[%c5_40, %c3_41] : memref<8x4xf32, #tpu.memory_space<smem>>
    %c6 = arith.constant 6 : index
    %c0_42 = arith.constant 0 : index
    %24 = memref.load %arg1[%c6, %c0_42] : memref<8x4xf32, #tpu.memory_space<smem>>
    %c6_43 = arith.constant 6 : index
    %c1_44 = arith.constant 1 : index
    %25 = memref.load %arg1[%c6_43, %c1_44] : memref<8x4xf32, #tpu.memory_space<smem>>
    %c6_45 = arith.constant 6 : index
    %c2_46 = arith.constant 2 : index
    %26 = memref.load %arg1[%c6_45, %c2_46] : memref<8x4xf32, #tpu.memory_space<smem>>
    %c6_47 = arith.constant 6 : index
    %c3_48 = arith.constant 3 : index
    %27 = memref.load %arg1[%c6_47, %c3_48] : memref<8x4xf32, #tpu.memory_space<smem>>
    %c7 = arith.constant 7 : index
    %c0_49 = arith.constant 0 : index
    %28 = memref.load %arg1[%c7, %c0_49] : memref<8x4xf32, #tpu.memory_space<smem>>
    %c7_50 = arith.constant 7 : index
    %c1_51 = arith.constant 1 : index
    %29 = memref.load %arg1[%c7_50, %c1_51] : memref<8x4xf32, #tpu.memory_space<smem>>
    %c7_52 = arith.constant 7 : index
    %c2_53 = arith.constant 2 : index
    %30 = memref.load %arg1[%c7_52, %c2_53] : memref<8x4xf32, #tpu.memory_space<smem>>
    %c7_54 = arith.constant 7 : index
    %c3_55 = arith.constant 3 : index
    %31 = memref.load %arg1[%c7_54, %c3_55] : memref<8x4xf32, #tpu.memory_space<smem>>
    %c0_56 = arith.constant 0 : index
    %32 = memref.load %arg2[%c0_56] : memref<4xf32, #tpu.memory_space<smem>>
    %c1_57 = arith.constant 1 : index
    %33 = memref.load %arg2[%c1_57] : memref<4xf32, #tpu.memory_space<smem>>
    %c2_58 = arith.constant 2 : index
    %34 = memref.load %arg2[%c2_58] : memref<4xf32, #tpu.memory_space<smem>>
    %c3_59 = arith.constant 3 : index
    %35 = memref.load %arg2[%c3_59] : memref<4xf32, #tpu.memory_space<smem>>
    %c0_60 = arith.constant 0 : index
    %c0_61 = arith.constant 0 : index
    %36 = memref.load %arg3[%c0_60, %c0_61] : memref<4x2xf32, #tpu.memory_space<smem>>
    %c1_62 = arith.constant 1 : index
    %c0_63 = arith.constant 0 : index
    %37 = memref.load %arg3[%c1_62, %c0_63] : memref<4x2xf32, #tpu.memory_space<smem>>
    %c2_64 = arith.constant 2 : index
    %c0_65 = arith.constant 0 : index
    %38 = memref.load %arg3[%c2_64, %c0_65] : memref<4x2xf32, #tpu.memory_space<smem>>
    %c3_66 = arith.constant 3 : index
    %c0_67 = arith.constant 0 : index
    %39 = memref.load %arg3[%c3_66, %c0_67] : memref<4x2xf32, #tpu.memory_space<smem>>
    %c0_68 = arith.constant 0 : index
    %c1_69 = arith.constant 1 : index
    %40 = memref.load %arg3[%c0_68, %c1_69] : memref<4x2xf32, #tpu.memory_space<smem>>
    %c1_70 = arith.constant 1 : index
    %c1_71 = arith.constant 1 : index
    %41 = memref.load %arg3[%c1_70, %c1_71] : memref<4x2xf32, #tpu.memory_space<smem>>
    %c2_72 = arith.constant 2 : index
    %c1_73 = arith.constant 1 : index
    %42 = memref.load %arg3[%c2_72, %c1_73] : memref<4x2xf32, #tpu.memory_space<smem>>
    %c3_74 = arith.constant 3 : index
    %c1_75 = arith.constant 1 : index
    %43 = memref.load %arg3[%c3_74, %c1_75] : memref<4x2xf32, #tpu.memory_space<smem>>
    %c0_76 = arith.constant 0 : index
    %44 = memref.load %arg4[%c0_76] : memref<2xf32, #tpu.memory_space<smem>>
    %c1_77 = arith.constant 1 : index
    %45 = memref.load %arg4[%c1_77] : memref<2xf32, #tpu.memory_space<smem>>
    %c0_78 = arith.constant 0 : index
    %c0_79 = arith.constant 0 : index
    %c0_80 = arith.constant 0 : index
    %c0_81 = arith.constant 0 : index
    %c0_82 = arith.constant 0 : index
    %46 = vector.load %arg5[%c0_78, %c0_79, %c0_80, %c0_81, %c0_82] : memref<1x1x8x8x128xf32, #tpu.memory_space<vmem>>, vector<1x1x1x8x128xf32>
    %47 = vector.shape_cast %46 : vector<1x1x1x8x128xf32> to vector<8x128xf32>
    %48 = vector.broadcast %0 : f32 to vector<8x128xf32>
    %49 = arith.mulf %47, %48 : vector<8x128xf32>
    %50 = vector.broadcast %1 : f32 to vector<8x128xf32>
    %51 = arith.mulf %47, %50 : vector<8x128xf32>
    %52 = vector.broadcast %2 : f32 to vector<8x128xf32>
    %53 = arith.mulf %47, %52 : vector<8x128xf32>
    %54 = vector.broadcast %3 : f32 to vector<8x128xf32>
    %55 = arith.mulf %47, %54 : vector<8x128xf32>
    %c0_83 = arith.constant 0 : index
    %c0_84 = arith.constant 0 : index
    %c1_85 = arith.constant 1 : index
    %c0_86 = arith.constant 0 : index
    %c0_87 = arith.constant 0 : index
    %56 = vector.load %arg5[%c0_83, %c0_84, %c1_85, %c0_86, %c0_87] : memref<1x1x8x8x128xf32, #tpu.memory_space<vmem>>, vector<1x1x1x8x128xf32>
    %57 = vector.shape_cast %56 : vector<1x1x1x8x128xf32> to vector<8x128xf32>
    %58 = vector.broadcast %4 : f32 to vector<8x128xf32>
    %59 = arith.mulf %57, %58 : vector<8x128xf32>
    %60 = arith.addf %49, %59 : vector<8x128xf32>
    %61 = vector.broadcast %5 : f32 to vector<8x128xf32>
    %62 = arith.mulf %57, %61 : vector<8x128xf32>
    %63 = arith.addf %51, %62 : vector<8x128xf32>
    %64 = vector.broadcast %6 : f32 to vector<8x128xf32>
    %65 = arith.mulf %57, %64 : vector<8x128xf32>
    %66 = arith.addf %53, %65 : vector<8x128xf32>
    %67 = vector.broadcast %7 : f32 to vector<8x128xf32>
    %68 = arith.mulf %57, %67 : vector<8x128xf32>
    %69 = arith.addf %55, %68 : vector<8x128xf32>
    %c0_88 = arith.constant 0 : index
    %c0_89 = arith.constant 0 : index
    %c2_90 = arith.constant 2 : index
    %c0_91 = arith.constant 0 : index
    %c0_92 = arith.constant 0 : index
    %70 = vector.load %arg5[%c0_88, %c0_89, %c2_90, %c0_91, %c0_92] : memref<1x1x8x8x128xf32, #tpu.memory_space<vmem>>, vector<1x1x1x8x128xf32>
    %71 = vector.shape_cast %70 : vector<1x1x1x8x128xf32> to vector<8x128xf32>
    %72 = vector.broadcast %8 : f32 to vector<8x128xf32>
    %73 = arith.mulf %71, %72 : vector<8x128xf32>
    %74 = arith.addf %60, %73 : vector<8x128xf32>
    %75 = vector.broadcast %9 : f32 to vector<8x128xf32>
    %76 = arith.mulf %71, %75 : vector<8x128xf32>
    %77 = arith.addf %63, %76 : vector<8x128xf32>
    %78 = vector.broadcast %10 : f32 to vector<8x128xf32>
    %79 = arith.mulf %71, %78 : vector<8x128xf32>
    %80 = arith.addf %66, %79 : vector<8x128xf32>
    %81 = vector.broadcast %11 : f32 to vector<8x128xf32>
    %82 = arith.mulf %71, %81 : vector<8x128xf32>
    %83 = arith.addf %69, %82 : vector<8x128xf32>
    %c0_93 = arith.constant 0 : index
    %c0_94 = arith.constant 0 : index
    %c3_95 = arith.constant 3 : index
    %c0_96 = arith.constant 0 : index
    %c0_97 = arith.constant 0 : index
    %84 = vector.load %arg5[%c0_93, %c0_94, %c3_95, %c0_96, %c0_97] : memref<1x1x8x8x128xf32, #tpu.memory_space<vmem>>, vector<1x1x1x8x128xf32>
    %85 = vector.shape_cast %84 : vector<1x1x1x8x128xf32> to vector<8x128xf32>
    %86 = vector.broadcast %12 : f32 to vector<8x128xf32>
    %87 = arith.mulf %85, %86 : vector<8x128xf32>
    %88 = arith.addf %74, %87 : vector<8x128xf32>
    %89 = vector.broadcast %13 : f32 to vector<8x128xf32>
    %90 = arith.mulf %85, %89 : vector<8x128xf32>
    %91 = arith.addf %77, %90 : vector<8x128xf32>
    %92 = vector.broadcast %14 : f32 to vector<8x128xf32>
    %93 = arith.mulf %85, %92 : vector<8x128xf32>
    %94 = arith.addf %80, %93 : vector<8x128xf32>
    %95 = vector.broadcast %15 : f32 to vector<8x128xf32>
    %96 = arith.mulf %85, %95 : vector<8x128xf32>
    %97 = arith.addf %83, %96 : vector<8x128xf32>
    %c0_98 = arith.constant 0 : index
    %c0_99 = arith.constant 0 : index
    %c4_100 = arith.constant 4 : index
    %c0_101 = arith.constant 0 : index
    %c0_102 = arith.constant 0 : index
    %98 = vector.load %arg5[%c0_98, %c0_99, %c4_100, %c0_101, %c0_102] : memref<1x1x8x8x128xf32, #tpu.memory_space<vmem>>, vector<1x1x1x8x128xf32>
    %99 = vector.shape_cast %98 : vector<1x1x1x8x128xf32> to vector<8x128xf32>
    %100 = vector.broadcast %16 : f32 to vector<8x128xf32>
    %101 = arith.mulf %99, %100 : vector<8x128xf32>
    %102 = arith.addf %88, %101 : vector<8x128xf32>
    %103 = vector.broadcast %17 : f32 to vector<8x128xf32>
    %104 = arith.mulf %99, %103 : vector<8x128xf32>
    %105 = arith.addf %91, %104 : vector<8x128xf32>
    %106 = vector.broadcast %18 : f32 to vector<8x128xf32>
    %107 = arith.mulf %99, %106 : vector<8x128xf32>
    %108 = arith.addf %94, %107 : vector<8x128xf32>
    %109 = vector.broadcast %19 : f32 to vector<8x128xf32>
    %110 = arith.mulf %99, %109 : vector<8x128xf32>
    %111 = arith.addf %97, %110 : vector<8x128xf32>
    %c0_103 = arith.constant 0 : index
    %c0_104 = arith.constant 0 : index
    %c5_105 = arith.constant 5 : index
    %c0_106 = arith.constant 0 : index
    %c0_107 = arith.constant 0 : index
    %112 = vector.load %arg5[%c0_103, %c0_104, %c5_105, %c0_106, %c0_107] : memref<1x1x8x8x128xf32, #tpu.memory_space<vmem>>, vector<1x1x1x8x128xf32>
    %113 = vector.shape_cast %112 : vector<1x1x1x8x128xf32> to vector<8x128xf32>
    %114 = vector.broadcast %20 : f32 to vector<8x128xf32>
    %115 = arith.mulf %113, %114 : vector<8x128xf32>
    %116 = arith.addf %102, %115 : vector<8x128xf32>
    %117 = vector.broadcast %21 : f32 to vector<8x128xf32>
    %118 = arith.mulf %113, %117 : vector<8x128xf32>
    %119 = arith.addf %105, %118 : vector<8x128xf32>
    %120 = vector.broadcast %22 : f32 to vector<8x128xf32>
    %121 = arith.mulf %113, %120 : vector<8x128xf32>
    %122 = arith.addf %108, %121 : vector<8x128xf32>
    %123 = vector.broadcast %23 : f32 to vector<8x128xf32>
    %124 = arith.mulf %113, %123 : vector<8x128xf32>
    %125 = arith.addf %111, %124 : vector<8x128xf32>
    %c0_108 = arith.constant 0 : index
    %c0_109 = arith.constant 0 : index
    %c6_110 = arith.constant 6 : index
    %c0_111 = arith.constant 0 : index
    %c0_112 = arith.constant 0 : index
    %126 = vector.load %arg5[%c0_108, %c0_109, %c6_110, %c0_111, %c0_112] : memref<1x1x8x8x128xf32, #tpu.memory_space<vmem>>, vector<1x1x1x8x128xf32>
    %127 = vector.shape_cast %126 : vector<1x1x1x8x128xf32> to vector<8x128xf32>
    %128 = vector.broadcast %24 : f32 to vector<8x128xf32>
    %129 = arith.mulf %127, %128 : vector<8x128xf32>
    %130 = arith.addf %116, %129 : vector<8x128xf32>
    %131 = vector.broadcast %25 : f32 to vector<8x128xf32>
    %132 = arith.mulf %127, %131 : vector<8x128xf32>
    %133 = arith.addf %119, %132 : vector<8x128xf32>
    %134 = vector.broadcast %26 : f32 to vector<8x128xf32>
    %135 = arith.mulf %127, %134 : vector<8x128xf32>
    %136 = arith.addf %122, %135 : vector<8x128xf32>
    %137 = vector.broadcast %27 : f32 to vector<8x128xf32>
    %138 = arith.mulf %127, %137 : vector<8x128xf32>
    %139 = arith.addf %125, %138 : vector<8x128xf32>
    %c0_113 = arith.constant 0 : index
    %c0_114 = arith.constant 0 : index
    %c7_115 = arith.constant 7 : index
    %c0_116 = arith.constant 0 : index
    %c0_117 = arith.constant 0 : index
    %140 = vector.load %arg5[%c0_113, %c0_114, %c7_115, %c0_116, %c0_117] : memref<1x1x8x8x128xf32, #tpu.memory_space<vmem>>, vector<1x1x1x8x128xf32>
    %141 = vector.shape_cast %140 : vector<1x1x1x8x128xf32> to vector<8x128xf32>
    %142 = vector.broadcast %28 : f32 to vector<8x128xf32>
    %143 = arith.mulf %141, %142 : vector<8x128xf32>
    %144 = arith.addf %130, %143 : vector<8x128xf32>
    %145 = vector.broadcast %29 : f32 to vector<8x128xf32>
    %146 = arith.mulf %141, %145 : vector<8x128xf32>
    %147 = arith.addf %133, %146 : vector<8x128xf32>
    %148 = vector.broadcast %30 : f32 to vector<8x128xf32>
    %149 = arith.mulf %141, %148 : vector<8x128xf32>
    %150 = arith.addf %136, %149 : vector<8x128xf32>
    %151 = vector.broadcast %31 : f32 to vector<8x128xf32>
    %152 = arith.mulf %141, %151 : vector<8x128xf32>
    %153 = arith.addf %139, %152 : vector<8x128xf32>
    %154 = vector.broadcast %32 : f32 to vector<8x128xf32>
    %155 = arith.addf %144, %154 : vector<8x128xf32>
    %cst = arith.constant 0.000000e+00 : f32
    %156 = vector.broadcast %cst : f32 to vector<8x128xf32>
    %157 = arith.maximumf %155, %156 : vector<8x128xf32>
    %158 = vector.broadcast %36 : f32 to vector<8x128xf32>
    %159 = arith.mulf %157, %158 : vector<8x128xf32>
    %160 = vector.broadcast %40 : f32 to vector<8x128xf32>
    %161 = arith.mulf %157, %160 : vector<8x128xf32>
    %162 = vector.broadcast %33 : f32 to vector<8x128xf32>
    %163 = arith.addf %147, %162 : vector<8x128xf32>
    %cst_118 = arith.constant 0.000000e+00 : f32
    %164 = vector.broadcast %cst_118 : f32 to vector<8x128xf32>
    %165 = arith.maximumf %163, %164 : vector<8x128xf32>
    %166 = vector.broadcast %37 : f32 to vector<8x128xf32>
    %167 = arith.mulf %165, %166 : vector<8x128xf32>
    %168 = arith.addf %159, %167 : vector<8x128xf32>
    %169 = vector.broadcast %41 : f32 to vector<8x128xf32>
    %170 = arith.mulf %165, %169 : vector<8x128xf32>
    %171 = arith.addf %161, %170 : vector<8x128xf32>
    %172 = vector.broadcast %34 : f32 to vector<8x128xf32>
    %173 = arith.addf %150, %172 : vector<8x128xf32>
    %cst_119 = arith.constant 0.000000e+00 : f32
    %174 = vector.broadcast %cst_119 : f32 to vector<8x128xf32>
    %175 = arith.maximumf %173, %174 : vector<8x128xf32>
    %176 = vector.broadcast %38 : f32 to vector<8x128xf32>
    %177 = arith.mulf %175, %176 : vector<8x128xf32>
    %178 = arith.addf %168, %177 : vector<8x128xf32>
    %179 = vector.broadcast %42 : f32 to vector<8x128xf32>
    %180 = arith.mulf %175, %179 : vector<8x128xf32>
    %181 = arith.addf %171, %180 : vector<8x128xf32>
    %182 = vector.broadcast %35 : f32 to vector<8x128xf32>
    %183 = arith.addf %153, %182 : vector<8x128xf32>
    %cst_120 = arith.constant 0.000000e+00 : f32
    %184 = vector.broadcast %cst_120 : f32 to vector<8x128xf32>
    %185 = arith.maximumf %183, %184 : vector<8x128xf32>
    %186 = vector.broadcast %39 : f32 to vector<8x128xf32>
    %187 = arith.mulf %185, %186 : vector<8x128xf32>
    %188 = arith.addf %178, %187 : vector<8x128xf32>
    %189 = vector.broadcast %43 : f32 to vector<8x128xf32>
    %190 = arith.mulf %185, %189 : vector<8x128xf32>
    %191 = arith.addf %181, %190 : vector<8x128xf32>
    %192 = vector.broadcast %44 : f32 to vector<8x128xf32>
    %193 = arith.addf %188, %192 : vector<8x128xf32>
    %194 = math.tanh %193 : vector<8x128xf32>
    %cst_121 = arith.constant -3.000000e-01 : f32
    %cst_122 = arith.constant 3.000000e-01 : f32
    %195 = vector.broadcast %cst_121 : f32 to vector<8x128xf32>
    %196 = arith.maximumf %195, %194 : vector<8x128xf32>
    %197 = vector.broadcast %cst_122 : f32 to vector<8x128xf32>
    %198 = arith.minimumf %197, %196 : vector<8x128xf32>
    %199 = vector.broadcast %45 : f32 to vector<8x128xf32>
    %200 = arith.addf %191, %199 : vector<8x128xf32>
    %cst_123 = arith.constant 0.000000e+00 : f32
    %201 = vector.broadcast %cst_123 : f32 to vector<8x128xf32>
    %202 = arith.maximumf %200, %201 : vector<8x128xf32>
    %cst_124 = arith.constant 0.00999999977 : f32
    %cst_125 = arith.constant 1.800000e+01 : f32
    %203 = vector.broadcast %cst_124 : f32 to vector<8x128xf32>
    %204 = arith.maximumf %203, %202 : vector<8x128xf32>
    %205 = vector.broadcast %cst_125 : f32 to vector<8x128xf32>
    %206 = arith.minimumf %205, %204 : vector<8x128xf32>
    %207 = vector.shape_cast %198 : vector<8x128xf32> to vector<1x8x128xf32>
    %208 = vector.shape_cast %206 : vector<8x128xf32> to vector<1x8x128xf32>
    %209 = tpu.concatenate %207, %208 in 0 : vector<1x8x128xf32>, vector<1x8x128xf32> -> vector<2x8x128xf32>
    %c0_126 = arith.constant 0 : index
    %c0_127 = arith.constant 0 : index
    %c0_128 = arith.constant 0 : index
    %c0_129 = arith.constant 0 : index
    %c0_130 = arith.constant 0 : index
    %210 = vector.load %arg6[%c0_126, %c0_127, %c0_128, %c0_129, %c0_130] : memref<1x1x2x8x128xf32, #tpu.memory_space<vmem>>, vector<1x1x2x8x128xf32>
    %211 = vector.shape_cast %210 : vector<1x1x2x8x128xf32> to vector<2x8x128xf32>
    %212 = vector.shape_cast %209 : vector<2x8x128xf32> to vector<1x1x2x8x128xf32>
    tpu.vector_store %arg6[%c0_126, %c0_127, %c0_128, %c0_129, %c0_130], %212 {strides = array<i32>} : memref<1x1x2x8x128xf32, #tpu.memory_space<vmem>>, vector<1x1x2x8x128xf32>,
    return
  }
  func.func @transform_0(%arg0: i32) -> (i32, i32) {
    %c0_i32 = arith.constant 0 : i32
    %c0_i32_0 = arith.constant 0 : i32
    %c0_i32_1 = arith.constant 0 : i32
    return %c0_i32, %c0_i32_0 : i32, i32
  }
  func.func @transform_1(%arg0: i32) -> i32 {
    %c0_i32 = arith.constant 0 : i32
    %c0_i32_0 = arith.constant 0 : i32
    return %c0_i32 : i32
  }
  func.func @transform_2(%arg0: i32) -> (i32, i32) {
    %c0_i32 = arith.constant 0 : i32
    %c0_i32_0 = arith.constant 0 : i32
    %c0_i32_1 = arith.constant 0 : i32
    return %c0_i32, %c0_i32_0 : i32, i32
  }
  func.func @transform_3(%arg0: i32) -> i32 {
    %c0_i32 = arith.constant 0 : i32
    %c0_i32_0 = arith.constant 0 : i32
    return %c0_i32 : i32
  }
  func.func @transform_4(%arg0: i32) -> (i32, i32, i32, i32, i32) {
    %c0_i32 = arith.constant 0 : i32
    %c0_i32_0 = arith.constant 0 : i32
    %c0_i32_1 = arith.constant 0 : i32
    %c0_i32_2 = arith.constant 0 : i32
    %c0_i32_3 = arith.constant 0 : i32
    return %arg0, %c0_i32, %c0_i32_0, %c0_i32_1, %c0_i32_2 : i32, i32, i32, i32, i32
  }
  func.func @transform_5(%arg0: i32) -> (i32, i32, i32, i32, i32) {
    %c0_i32 = arith.constant 0 : i32
    %c0_i32_0 = arith.constant 0 : i32
    %c0_i32_1 = arith.constant 0 : i32
    %c0_i32_2 = arith.constant 0 : i32
    %c0_i32_3 = arith.constant 0 : i32
    return %arg0, %c0_i32, %c0_i32_0, %c0_i32_1, %c0_i32_2 : i32, i32, i32, i32, i32
  }
}

</mosaic_0001>

<llo_original>
// kernel: mlp_2_1_forward.1
$region0: #{mlp_2_1_forward.1}
  #allocation0 [shape = 'u32[]', space=smem, size = 0x4, offset = 0x4, fixed_abs, tag = 'smem constant byte address 0x4 - core index']
  #allocation1 [shape = 'u32[144,128]{1,0:T(1,128)}', space=vmem, size = 0x12000, scoped, tag = 'internal scratch']
  %s0 = inlined_call_operand.vmem [shape: f32[8,4], index: 0, kind: input, shape index: {}]
  %s1 = inlined_call_operand.vmem [shape: f32[4], index: 1, kind: input, shape index: {}]
  %s2 = inlined_call_operand.vmem [shape: f32[4,2], index: 2, kind: input, shape index: {}]
  %s3 = inlined_call_operand.vmem [shape: f32[2], index: 3, kind: input, shape index: {}]
  %s4 = inlined_call_operand.vmem [shape: f32[1,1,8,8,128], index: 4, kind: input, shape index: {}]
  %s5 = inlined_call_operand.vmem [shape: f32[1,1,2,8,128], index: 5, kind: output, shape index: {}]
  %s6 = sld [smem:[#allocation0]]
  $region46: #{mlp_2_1_forward.1} parent=0
    _
  %s8 = ssub.s32 1, %s6
  %s9 = scalar_select 0, %s8, %s6
  $region1: #{mlp_2_1_forward.1} parent=0
    #allocation2 [shape = 'u8[4096]{0}', space=smem, size = 0x1000, scoped, tag = 'input window, operand 0, single buffered']
    #allocation3 [shape = 's32[1]{0}', space=sflag, size = 0x4, scoped, tag = 'scoped memory for mlp_2_1_forward.1']
    #allocation4 [shape = 'u8[512]{0}', space=smem, size = 0x200, scoped, tag = 'input window, operand 1, single buffered']
    #allocation5 [shape = 's32[1]{0}', space=sflag, size = 0x4, scoped, tag = 'scoped memory for mlp_2_1_forward.1']
    #allocation6 [shape = 'u8[2048]{0}', space=smem, size = 0x800, scoped, tag = 'input window, operand 2, single buffered']
    #allocation7 [shape = 'u8[512]{0}', space=smem, size = 0x200, scoped, tag = 'input window, operand 3, single buffered']
    #allocation8 [shape = 's32[1]{0}', space=sflag, size = 0x4, scoped, tag = 'scoped memory for mlp_2_1_forward.1']
    %10 = vsyncpa [#allocation3], 0
    %11 = vsyncpa [#allocation5], 0
    %12 = vsyncpa [#allocation8], 0
    // Predicated region
    $region2: #{mlp_2_1_forward.1} parent=1 // pred_check
      _
    $region3: #{mlp_2_1_forward.1} parent=1 // pred_check_branch
      %14 = sbr.rel (0) target = $region5
    $region4: #{mlp_2_1_forward.1} parent=1 // pred_region
      %s16 = ssub.s32 128, 128
      %17 = vsyncadd [#allocation3], %s16
      %s19 = sshll.u32 %s0, 4
      %s20 = int_to_ptr.vmem [resolvable:$true] %s19
      %22 = dma.vmem_to_smem %s20, 128, [#allocation2], [#allocation3]
    $region5: #{mlp_2_1_forward.1} parent=1 // pred_fallthru
      _
    // Predicated region
    $region6: #{mlp_2_1_forward.1} parent=1 // pred_check
      _
    $region7: #{mlp_2_1_forward.1} parent=1 // pred_check_branch
      %24 = sbr.rel (0) target = $region9
    $region8: #{mlp_2_1_forward.1} parent=1 // pred_region
      %s26 = ssub.s32 16, 16
      %27 = vsyncadd [#allocation5], %s26
      %s29 = sshll.u32 %s1, 4
      %s30 = int_to_ptr.vmem [resolvable:$true] %s29
      %32 = dma.vmem_to_smem %s30, 16, [#allocation4], [#allocation5]
    $region9: #{mlp_2_1_forward.1} parent=1 // pred_fallthru
      _
    // Predicated region
    $region10: #{mlp_2_1_forward.1} parent=1 // pred_check
      _
    $region11: #{mlp_2_1_forward.1} parent=1 // pred_check_branch
      %34 = sbr.rel (0) target = $region13
    $region12: #{mlp_2_1_forward.1} parent=1 // pred_region
      %s36 = ssub.s32 64, 64
      %37 = vsyncadd [#allocation5], %s36
      %s39 = sshll.u32 %s2, 4
      %s40 = int_to_ptr.vmem [resolvable:$true] %s39
      %42 = dma.vmem_to_smem %s40, 64, [#allocation6], [#allocation5]
    $region13: #{mlp_2_1_forward.1} parent=1 // pred_fallthru
      _
    // Predicated region
    $region14: #{mlp_2_1_forward.1} parent=1 // pred_check
      _
    $region15: #{mlp_2_1_forward.1} parent=1 // pred_check_branch
      %44 = sbr.rel (0) target = $region17
    $region16: #{mlp_2_1_forward.1} parent=1 // pred_region
      %s46 = ssub.s32 16, 16
      %47 = vsyncadd [#allocation8], %s46
      %s49 = sshll.u32 %s3, 4
      %s50 = int_to_ptr.vmem [resolvable:$true] %s49
      %52 = dma.vmem_to_smem %s50, 16, [#allocation7], [#allocation8]
    $region17: #{mlp_2_1_forward.1} parent=1 // pred_fallthru
      _
    // Predicated region
    $region18: #{mlp_2_1_forward.1} parent=1 // pred_check
      _
    $region19: #{mlp_2_1_forward.1} parent=1 // pred_check_branch
      %54 = sbr.rel (0) target = $region21
    $region20: #{mlp_2_1_forward.1} parent=1 // pred_region
      _
    $region21: #{mlp_2_1_forward.1} parent=1 // pred_fallthru
      _
    // Predicated region
    $region22: #{mlp_2_1_forward.1} parent=1 // pred_check
      _
    $region23: #{mlp_2_1_forward.1} parent=1 // pred_check_branch
      %56 = sbr.rel (0) target = $region25
    $region24: #{mlp_2_1_forward.1} parent=1 // pred_region
      %57 = dma.done [#allocation3], 128
    $region25: #{mlp_2_1_forward.1} parent=1 // pred_fallthru
      _
    // Predicated region
    $region26: #{mlp_2_1_forward.1} parent=1 // pred_check
      _
    $region27: #{mlp_2_1_forward.1} parent=1 // pred_check_branch
      %59 = sbr.rel (0) target = $region29
    $region28: #{mlp_2_1_forward.1} parent=1 // pred_region
      %60 = dma.done [#allocation5], 16
    $region29: #{mlp_2_1_forward.1} parent=1 // pred_fallthru
      _
    // Predicated region
    $region30: #{mlp_2_1_forward.1} parent=1 // pred_check
      _
    $region31: #{mlp_2_1_forward.1} parent=1 // pred_check_branch
      %62 = sbr.rel (0) target = $region33
    $region32: #{mlp_2_1_forward.1} parent=1 // pred_region
      %63 = dma.done [#allocation5], 64
    $region33: #{mlp_2_1_forward.1} parent=1 // pred_fallthru
      _
    // Predicated region
    $region34: #{mlp_2_1_forward.1} parent=1 // pred_check
      _
    $region35: #{mlp_2_1_forward.1} parent=1 // pred_check_branch
      %65 = sbr.rel (0) target = $region37
    $region36: #{mlp_2_1_forward.1} parent=1 // pred_region
      %66 = dma.done [#allocation8], 16
    $region37: #{mlp_2_1_forward.1} parent=1 // pred_fallthru
      _
    %67 = sfence
    %s68 = sld [smem:[#allocation2]]
    %s69 = sld [smem:[#allocation2 + $0x1]]
    %s70 = sld [smem:[#allocation2 + $0x2]]
    %s71 = sld [smem:[#allocation2 + $0x3]]
    %s72 = sld [smem:[#allocation2 + $0x80]]
    %s73 = sld [smem:[#allocation2 + $0x81]]
    %s74 = sld [smem:[#allocation2 + $0x82]]
    %s75 = sld [smem:[#allocation2 + $0x83]]
    %s76 = sld [smem:[#allocation2 + $0x100]]
    %s77 = sld [smem:[#allocation2 + $0x101]]
    %s78 = sld [smem:[#allocation2 + $0x102]]
    %s79 = sld [smem:[#allocation2 + $0x103]]
    %s80 = sld [smem:[#allocation2 + $0x180]]
    %s81 = sld [smem:[#allocation2 + $0x181]]
    %s82 = sld [smem:[#allocation2 + $0x182]]
    %s83 = sld [smem:[#allocation2 + $0x183]]
    %s84 = sld [smem:[#allocation2 + $0x200]]
    %s85 = sld [smem:[#allocation2 + $0x201]]
    %s86 = sld [smem:[#allocation2 + $0x202]]
    %s87 = sld [smem:[#allocation2 + $0x203]]
    %s88 = sld [smem:[#allocation2 + $0x280]]
    %s89 = sld [smem:[#allocation2 + $0x281]]
    %s90 = sld [smem:[#allocation2 + $0x282]]
    %s91 = sld [smem:[#allocation2 + $0x283]]
    %s92 = sld [smem:[#allocation2 + $0x300]]
    %s93 = sld [smem:[#allocation2 + $0x301]]
    %s94 = sld [smem:[#allocation2 + $0x302]]
    %s95 = sld [smem:[#allocation2 + $0x303]]
    %s96 = sld [smem:[#allocation2 + $0x380]]
    %s97 = sld [smem:[#allocation2 + $0x381]]
    %s98 = sld [smem:[#allocation2 + $0x382]]
    %s99 = sld [smem:[#allocation2 + $0x383]]
    %s100 = sld [smem:[#allocation4]]
    %s101 = sld [smem:[#allocation4 + $0x1]]
    %s102 = sld [smem:[#allocation4 + $0x2]]
    %s103 = sld [smem:[#allocation4 + $0x3]]
    %s104 = sld [smem:[#allocation6]]
    %s105 = sld [smem:[#allocation6 + $0x80]]
    %s106 = sld [smem:[#allocation6 + $0x100]]
    %s107 = sld [smem:[#allocation6 + $0x180]]
    %s108 = sld [smem:[#allocation6 + $0x1]]
    %s109 = sld [smem:[#allocation6 + $0x81]]
    %s110 = sld [smem:[#allocation6 + $0x101]]
    %s111 = sld [smem:[#allocation6 + $0x181]]
    %s112 = sld [smem:[#allocation7]]
    %s113 = sld [smem:[#allocation7 + $0x1]]
    %v114 = vld [vmem:[%s4] sm:$0xff]
    %v115 = vstv %s68
    %v116 = vmul.f32 %v114, %v115
    %v117 = vstv %s69
    %v118 = vmul.f32 %v114, %v117
    %v119 = vstv %s70
    %v120 = vmul.f32 %v114, %v119
    %v121 = vstv %s71
    %v122 = vmul.f32 %v114, %v121
    %s123 = scalar_lea.vmem %s4, 8
    %v124 = vld [vmem:[%s123] sm:$0xff]
    %v125 = vstv %s72
    %v126 = vmul.f32 %v124, %v125
    %v127 = vadd.f32 %v116, %v126
    %v128 = vstv %s73
    %v129 = vmul.f32 %v124, %v128
    %v130 = vadd.f32 %v118, %v129
    %v131 = vstv %s74
    %v132 = vmul.f32 %v124, %v131
    %v133 = vadd.f32 %v120, %v132
    %v134 = vstv %s75
    %v135 = vmul.f32 %v124, %v134
    %v136 = vadd.f32 %v122, %v135
    %s137 = scalar_lea.vmem %s4, 16
    %v138 = vld [vmem:[%s137] sm:$0xff]
    %v139 = vstv %s76
    %v140 = vmul.f32 %v138, %v139
    %v141 = vadd.f32 %v127, %v140
    %v142 = vstv %s77
    %v143 = vmul.f32 %v138, %v142
    %v144 = vadd.f32 %v130, %v143
    %v145 = vstv %s78
    %v146 = vmul.f32 %v138, %v145
    %v147 = vadd.f32 %v133, %v146
    %v148 = vstv %s79
    %v149 = vmul.f32 %v138, %v148
    %v150 = vadd.f32 %v136, %v149
    %s151 = scalar_lea.vmem %s4, 24
    %v152 = vld [vmem:[%s151] sm:$0xff]
    %v153 = vstv %s80
    %v154 = vmul.f32 %v152, %v153
    %v155 = vadd.f32 %v141, %v154
    %v156 = vstv %s81
    %v157 = vmul.f32 %v152, %v156
    %v158 = vadd.f32 %v144, %v157
    %v159 = vstv %s82
    %v160 = vmul.f32 %v152, %v159
    %v161 = vadd.f32 %v147, %v160
    %v162 = vstv %s83
    %v163 = vmul.f32 %v152, %v162
    %v164 = vadd.f32 %v150, %v163
    %s165 = scalar_lea.vmem %s4, 32
    %v166 = vld [vmem:[%s165] sm:$0xff]
    %v167 = vstv %s84
    %v168 = vmul.f32 %v166, %v167
    %v169 = vadd.f32 %v155, %v168
    %v170 = vstv %s85
    %v171 = vmul.f32 %v166, %v170
    %v172 = vadd.f32 %v158, %v171
    %v173 = vstv %s86
    %v174 = vmul.f32 %v166, %v173
    %v175 = vadd.f32 %v161, %v174
    %v176 = vstv %s87
    %v177 = vmul.f32 %v166, %v176
    %v178 = vadd.f32 %v164, %v177
    %s179 = scalar_lea.vmem %s4, 40
    %v180 = vld [vmem:[%s179] sm:$0xff]
    %v181 = vstv %s88
    %v182 = vmul.f32 %v180, %v181
    %v183 = vadd.f32 %v169, %v182
    %v184 = vstv %s89
    %v185 = vmul.f32 %v180, %v184
    %v186 = vadd.f32 %v172, %v185
    %v187 = vstv %s90
    %v188 = vmul.f32 %v180, %v187
    %v189 = vadd.f32 %v175, %v188
    %v190 = vstv %s91
    %v191 = vmul.f32 %v180, %v190
    %v192 = vadd.f32 %v178, %v191
    %s193 = scalar_lea.vmem %s4, 48
    %v194 = vld [vmem:[%s193] sm:$0xff]
    %v195 = vstv %s92
    %v196 = vmul.f32 %v194, %v195
    %v197 = vadd.f32 %v183, %v196
    %v198 = vstv %s93
    %v199 = vmul.f32 %v194, %v198
    %v200 = vadd.f32 %v186, %v199
    %v201 = vstv %s94
    %v202 = vmul.f32 %v194, %v201
    %v203 = vadd.f32 %v189, %v202
    %v204 = vstv %s95
    %v205 = vmul.f32 %v194, %v204
    %v206 = vadd.f32 %v192, %v205
    %s207 = scalar_lea.vmem %s4, 56
    %v208 = vld [vmem:[%s207] sm:$0xff]
    %v209 = vstv %s96
    %v210 = vmul.f32 %v208, %v209
    %v211 = vadd.f32 %v197, %v210
    %v212 = vstv %s97
    %v213 = vmul.f32 %v208, %v212
    %v214 = vadd.f32 %v200, %v213
    %v215 = vstv %s98
    %v216 = vmul.f32 %v208, %v215
    %v217 = vadd.f32 %v203, %v216
    %v218 = vstv %s99
    %v219 = vmul.f32 %v208, %v218
    %v220 = vadd.f32 %v206, %v219
    %v221 = vstv %s100
    %v222 = vadd.f32 %v211, %v221
    %v223 = vmax.f32 %v222, 0.0
    %v224 = vstv %s104
    %v225 = vmul.f32 %v223, %v224
    %v226 = vstv %s108
    %v227 = vmul.f32 %v223, %v226
    %v228 = vstv %s101
    %v229 = vadd.f32 %v214, %v228
    %v230 = vmax.f32 %v229, 0.0
    %v231 = vstv %s105
    %v232 = vmul.f32 %v230, %v231
    %v233 = vadd.f32 %v225, %v232
    %v234 = vstv %s109
    %v235 = vmul.f32 %v230, %v234
    %v236 = vadd.f32 %v227, %v235
    %v237 = vstv %s102
    %v238 = vadd.f32 %v217, %v237
    %v239 = vmax.f32 %v238, 0.0
    %v240 = vstv %s106
    %v241 = vmul.f32 %v239, %v240
    %v242 = vadd.f32 %v233, %v241
    %v243 = vstv %s110
    %v244 = vmul.f32 %v239, %v243
    %v245 = vadd.f32 %v236, %v244
    %v246 = vstv %s103
    %v247 = vadd.f32 %v220, %v246
    %v248 = vmax.f32 %v247, 0.0
    %v249 = vstv %s107
    %v250 = vmul.f32 %v248, %v249
    %v251 = vadd.f32 %v242, %v250
    %v252 = vstv %s111
    %v253 = vmul.f32 %v248, %v252
    %v254 = vadd.f32 %v245, %v253
    %v255 = vstv %s112
    %v256 = vadd.f32 %v251, %v255
    %v257 = vtanh.pop %v256
    %v258 = vmax.f32 %v257, -0.3
    %v259 = vmin.f32 %v258, 0.3
    %v260 = vstv %s113
    %v261 = vadd.f32 %v254, %v260
    %v262 = vmax.f32 %v261, 0.0
    %v263 = vmax.f32 %v262, 0.01
    %v264 = vmin.f32 %v263, 18.0
    %265 = vst [vmem:[%s5] sm:$0xff] %v259
    %266 = vst [vmem:[%s5 + $0x8] sm:$0xff] %v264
    // Predicated region
    $region38: #{mlp_2_1_forward.1} parent=1 // pred_check
      _
    $region39: #{mlp_2_1_forward.1} parent=1 // pred_check_branch
      %268 = sbr.rel (0) target = $region41
    $region40: #{mlp_2_1_forward.1} parent=1 // pred_region
      _
    $region41: #{mlp_2_1_forward.1} parent=1 // pred_fallthru
      _
    // Predicated region
    $region42: #{mlp_2_1_forward.1} parent=1 // pred_check
      _
    $region43: #{mlp_2_1_forward.1} parent=1 // pred_check_branch
      %270 = sbr.rel (0) target = $region45
    $region44: #{mlp_2_1_forward.1} parent=1 // pred_region
      _
    $region45: #{mlp_2_1_forward.1} parent=1 // pred_fallthru
      _
    %271 = vsyncpa [#allocation3], 1
    %272 = vsyncpa [#allocation5], 1
    %273 = vsyncpa [#allocation8], 1

</llo_original>
